<compile_context>
chip_gen: v5e
topology: v5e:2x2
jax: 0.10.0
libtpu: 0.0.40
codegen_flags: <defaults>
</compile_context>

<pallas_src>
import jax
import jax.numpy as jnp
from jax.experimental import pallas as pl
from jax.experimental.pallas import tpu as pltpu


# ----------------------------- Pallas kernel ---------------------------------

def _mean_teacher_fwd_kernel(x_ref, wc_ref, bc_ref, wh_ref, bh_ref, o_ref):
    """Conv-as-GEMM -> bias+ReLU -> per-image sum-pool -> fused two-head linear.

    x_ref : (CKK, B_TILE*HW)  bf16  im2col patches (lane dim = B_TILE*HW, mult. of 128)
    wc_ref: (F, CKK)          bf16  conv weight (PyTorch (F, C, 3, 3).reshape(F, -1))
    bc_ref: (F, 1)            f32   conv bias
    wh_ref: (F, 2*NC)         f32   [w_head0 | w_head1], pre-scaled by 1/HW (mean folded)
    bh_ref: (1, 2*NC)         f32   [b_head0 | b_head1]
    o_ref : (1, B_TILE, 2*NC) f32   fused logits for this batch tile
    """
    b_tile = o_ref.shape[1]
    hw = x_ref.shape[1] // b_tile

    # 3x3 conv for the whole batch tile as ONE MXU GEMM (bf16 in, f32 accumulate).
    h = jnp.dot(wc_ref[...], x_ref[...],
                preferred_element_type=jnp.float32)            # (F, B_TILE*HW)
    h = jnp.maximum(h + bc_ref[...], 0.0)                      # bias + ReLU (VPU)

    # Per-image global sum-pool: lane-aligned static slices + lane-axis reduce (XLU).
    # The 1/HW of the mean is folded into wh in the wrapper.
    pooled = jnp.concatenate(
        [jnp.sum(h[:, b * hw:(b + 1) * hw], axis=1, keepdims=True)
         for b in range(b_tile)],
        axis=1)                                                # (F, B_TILE) f32

    # Both classification heads fused into a single matmul, contracting over F.
    logits = jax.lax.dot_general(
        pooled, wh_ref[...], (((0,), (0,)), ((), ())),
        preferred_element_type=jnp.float32)                    # (B_TILE, 2*NC)
    o_ref[0] = logits + bh_ref[...]


def _run_model(patches, wc_t, bc, wh, bh, n, hw, b_tile):
    """patches: (CKK, N*HW) bf16.  Returns fused logits (N, 2*NC) f32."""
    feat, ckk = wc_t.shape
    nc2 = wh.shape[1]

    grid = pl.cdiv(n, b_tile)
    n_pad = grid * b_tile
    if n_pad != n:  # zero-pad the flattened batch axis up to a whole number of tiles
        patches = jnp.pad(patches, ((0, 0), (0, (n_pad - n) * hw)))

    out = pl.pallas_call(
        _mean_teacher_fwd_kernel,
        out_shape=jax.ShapeDtypeStruct((grid, b_tile, nc2), jnp.float32),
        grid_spec=pltpu.PrefetchScalarGridSpec(
            num_scalar_prefetch=0,
            grid=(grid,),
            in_specs=[
                pl.BlockSpec((ckk, b_tile * hw), lambda i: (0, i)),   # patches tile
                pl.BlockSpec((feat, ckk), lambda i: (0, 0)),          # conv weight
                pl.BlockSpec((feat, 1), lambda i: (0, 0)),            # conv bias
                pl.BlockSpec((feat, nc2), lambda i: (0, 0)),          # fused head weight
                pl.BlockSpec((1, nc2), lambda i: (0, 0)),             # fused head bias
            ],
            out_specs=pl.BlockSpec((1, b_tile, nc2), lambda i: (i, 0, 0)),
        ),
        compiler_params=pltpu.CompilerParams(
            dimension_semantics=("parallel",),        # independent batch tiles
            vmem_limit_bytes=32 * 1024 * 1024),       # explicit; tile uses only a few MiB
    )(patches, wc_t, bc, wh, bh)

    return out.reshape(n_pad, nc2)[:n]                # (N, 2*NC)


# ------------------------------ glue (JAX) -----------------------------------

def _im2col_lanes(x):
    """x: (N, C, H, W) f32 -> patches (C*9, N*H*W) bf16, same-padding 3x3.

    K order is (c, kh, kw) to match PyTorch conv weight.reshape(F, -1); the lane
    (last) dimension is N*H*W, a multiple of 128 for 16x16 images -> lane-dense."""
    n, c, h, w = x.shape
    xp = jnp.pad(x, ((0, 0), (0, 0), (1, 1), (1, 1)))
    shifts = [xp[:, :, dh:dh + h, dw:dw + w] for dh in range(3) for dw in range(3)]
    p = jnp.stack(shifts, axis=2)                           # (N, C, 9, H, W)
    p = p.reshape(n, c * 9, h * w)                          # (N, C*9, HW)
    p = jnp.transpose(p, (1, 0, 2)).reshape(c * 9, n * h * w)
    return p.astype(jnp.bfloat16)


@jax.jit
def _mean_teacher_forward(params, imgs):
    n, c, h, w = imgs.shape
    feat = params["wc"].shape[0]
    n_classes = params["w1"].shape[1]
    hw = h * w

    # TODO(synk): build the im2col patches inside the kernel (DMA the raw padded
    # image and form the 9 shifted views in VMEM) to remove the 9x HBM read
    # amplification of this XLA-side expansion.
    patches = _im2col_lanes(imgs.astype(jnp.float32))                 # (C*9, N*HW) bf16

    wc_t = params["wc"].reshape(feat, c * 9).astype(jnp.bfloat16)     # (F, C*9)
    bc = params["bc"].reshape(feat, 1).astype(jnp.float32)            # (F, 1)
    # Fuse the two heads and fold the 1/HW of the mean-pool into the weights.
    wh = jnp.concatenate([params["w1"], params["w2"]], axis=1) * (1.0 / hw)
    bh = jnp.concatenate([params["b1"], params["b2"]], axis=1)        # (1, 2*NC)

    # Keep >= 2 grid steps whenever N >= 2 (v7x has two TensorCores); cap the batch
    # tile so the double-buffered patch tile stays tiny vs. scoped VMEM (v7x: 32 MiB).
    b_tile = max(1, min(64, n // 2))

    out = _run_model(patches, wc_t, bc, wh, bh, n, hw, b_tile)        # (N, 2*NC)
    return out[:, :n_classes], out[:, n_classes:]


class MeanTeacher:
    """JAX/Pallas re-implementation of the MeanTeacher wrapper."""

    def __init__(self, m, c_in=4, feat=32, n_classes=8, seed=0):
        self.m = m
        self.single_head = False
        self.use_ema = False
        self.c_in, self.feat, self.n_classes = c_in, feat, n_classes

        key = jax.random.PRNGKey(seed)
        ks = jax.random.split(key, 6)
        self.params = {
            "wc": jax.random.normal(ks[0], (feat, c_in, 3, 3), jnp.float32) * 0.1,
            "bc": jax.random.normal(ks[1], (feat,), jnp.float32) * 0.1,
            "w1": jax.random.normal(ks[2], (feat, n_classes), jnp.float32) * 0.1,
            "b1": jax.random.normal(ks[3], (1, n_classes), jnp.float32) * 0.1,
            "w2": jax.random.normal(ks[4], (feat, n_classes), jnp.float32) * 0.1,
            "b2": jax.random.normal(ks[5], (1, n_classes), jnp.float32) * 0.1,
        }
        # param_k.data.copy_(param_q.data): EMA model starts as an exact copy.
        self.ema_params = jax.tree_util.tree_map(jnp.array, self.params)

    def eval(self):
        self.single_head = True
        return self

    def momentum_update_ema_model(self, global_step=None):
        # EMA parameter update (elementwise glue, not the forward hot path).
        # Matches the PyTorch reference exactly, including `if global_step` being
        # falsy at global_step=0 (schedule skipped at step 0, like the original).
        m = min(1 - 1 / (global_step + 1), self.m) if global_step else self.m
        self.ema_params = jax.tree_util.tree_map(
            lambda pk, pq: pk * m + pq * (1.0 - m), self.ema_params, self.params)

    def forward(self, imgs, use_ema=None):
        if use_ema is not None:
            self.use_ema = use_ema
        params = self.ema_params if self.use_ema else self.params
        o1, o2 = _mean_teacher_forward(params, imgs)
        return o1 if self.single_head else (o1, o2)

    __call__ = forward


# ------------------------------ reference ------------------------------------

def _reference(params, imgs):
    """Plain-JAX reference mirroring the kernel's bf16-input / f32-accumulate conv."""
    feat = params["wc"].shape[0]
    hp = jax.lax.Precision.HIGHEST
    x = imgs.astype(jnp.bfloat16).astype(jnp.float32)
    w = params["wc"].astype(jnp.bfloat16).astype(jnp.float32)        # (F, C, 3, 3)
    h = jax.lax.conv_general_dilated(
        x, w, window_strides=(1, 1), padding=((1, 1), (1, 1)),
        dimension_numbers=("NCHW", "OIHW", "NCHW"), precision=hp)    # (N, F, H, W)
    h = jnp.maximum(h + params["bc"].reshape(1, feat, 1, 1), 0.0)
    pooled = h.mean(axis=(2, 3))                                     # (N, F)
    o1 = jnp.dot(pooled, params["w1"], precision=hp) + params["b1"]
    o2 = jnp.dot(pooled, params["w2"], precision=hp) + params["b2"]
    return o1, o2


# --------------------------------- main ---------------------------------------

if __name__ == "__main__":
    key = jax.random.PRNGKey(0)
    imgs = jax.random.normal(key, (2, 4, 16, 16), jnp.float32)       # NCHW

    mt = MeanTeacher(m=0.999, c_in=4, feat=32, n_classes=8, seed=0)

    # student path (use_ema=False), multi-head output
    out_student = mt(imgs, use_ema=False)
    out_student = jax.tree_util.tree_map(jax.block_until_ready, out_student)

    # teacher path (use_ema=True) after a momentum update; single-head via eval()
    mt.momentum_update_ema_model(global_step=10)
    mt.eval()
    out_teacher = mt(imgs, use_ema=True)
    out_teacher = jax.block_until_ready(out_teacher)

    # correctness check against plain-JAX reference (bf16 conv inputs on both sides)
    ref0, ref1 = _reference(mt.params, imgs)
    assert jnp.allclose(out_student[0], ref0, atol=2e-3, rtol=2e-3)
    assert jnp.allclose(out_student[1], ref1, atol=2e-3, rtol=2e-3)
    ref_t0, _ = _reference(mt.ema_params, imgs)
    assert jnp.allclose(out_teacher, ref_t0, atol=2e-3, rtol=2e-3)

    print("KERNEL_OK")
</pallas_src>

<mosaic_0001>
module attributes {stable_mosaic.version = 11 : i64} {
  func.func @_mean_teacher_fwd_kernel(%arg0: i32, %arg1: memref<36x256xbf16, #tpu.memory_space<vmem>>, %arg2: memref<32x36xbf16, #tpu.memory_space<vmem>>, %arg3: memref<32x1xf32, #tpu.memory_space<vmem>>, %arg4: memref<32x16xf32, #tpu.memory_space<vmem>>, %arg5: memref<1x16xf32, #tpu.memory_space<vmem>>, %arg6: memref<1x1x16xf32, #tpu.memory_space<vmem>>) attributes {dimension_semantics = [#tpu.dimension_semantics<parallel>], iteration_bounds = array<i64: 2>, scalar_prefetch = 0 : i64, scratch_operands = 0 : i64, tpu.core_type = #tpu.core_type<tc>, window_params = [{transform_indices = @transform_0, window_bounds = array<i64: 36, 256>}, {pipeline_mode = #tpu.pipeline_mode<synchronous>, transform_indices = @transform_1, window_bounds = array<i64: 32, 36>}, {pipeline_mode = #tpu.pipeline_mode<synchronous>, transform_indices = @transform_2, window_bounds = array<i64: 32, 1>}, {pipeline_mode = #tpu.pipeline_mode<synchronous>, transform_indices = @transform_3, window_bounds = array<i64: 32, 16>}, {pipeline_mode = #tpu.pipeline_mode<synchronous>, transform_indices = @transform_4, window_bounds = array<i64: 1, 16>}, {transform_indices = @transform_5, window_bounds = array<i64: 1, 1, 16>}]} {
    %c0 = arith.constant 0 : index
    %c0_0 = arith.constant 0 : index
    %0 = vector.load %arg2[%c0, %c0_0] : memref<32x36xbf16, #tpu.memory_space<vmem>>, vector<32x36xbf16>
    %c0_1 = arith.constant 0 : index
    %c0_2 = arith.constant 0 : index
    %1 = vector.load %arg1[%c0_1, %c0_2] : memref<36x256xbf16, #tpu.memory_space<vmem>>, vector<36x256xbf16>
    %cst = arith.constant dense<0.000000e+00> : vector<32x256xf32>
    %2 = tpu.matmul %0, %1, %cst {dimension_numbers = #tpu.dot_dimension_numbers<[1], [0], [0], [1], [0, 0, 1, 1], [], []>} : vector<32x36xbf16>, vector<36x256xbf16>, vector<32x256xf32> -> vector<32x256xf32>
    %c0_3 = arith.constant 0 : index
    %c0_4 = arith.constant 0 : index
    %3 = vector.load %arg3[%c0_3, %c0_4] : memref<32x1xf32, #tpu.memory_space<vmem>>, vector<32x1xf32>
    %4 = vector.broadcast %3 : vector<32x1xf32> to vector<32x256xf32>
    %5 = arith.addf %2, %4 : vector<32x256xf32>
    %cst_5 = arith.constant 0.000000e+00 : f32
    %6 = vector.broadcast %cst_5 : f32 to vector<32x256xf32>
    %7 = arith.maximumf %5, %6 : vector<32x256xf32>
    %cst_6 = arith.constant dense<0.000000e+00> : vector<32xf32>
    %8 = vector.multi_reduction <add>, %7, %cst_6 [1] : vector<32x256xf32> to vector<32xf32>
    %9 = vector.shape_cast %8 : vector<32xf32> to vector<32x1xf32>
    %c0_7 = arith.constant 0 : index
    %c0_8 = arith.constant 0 : index
    %10 = vector.load %arg4[%c0_7, %c0_8] : memref<32x16xf32, #tpu.memory_space<vmem>>, vector<32x16xf32>
    %cst_9 = arith.constant dense<0.000000e+00> : vector<1x16xf32>
    %11 = tpu.matmul %9, %10, %cst_9 {dimension_numbers = #tpu.dot_dimension_numbers<[0], [0], [1], [1], [0, 1, 1, 1], [], []>} : vector<32x1xf32>, vector<32x16xf32>, vector<1x16xf32> -> vector<1x16xf32>
    %c0_10 = arith.constant 0 : index
    %c0_11 = arith.constant 0 : index
    %12 = vector.load %arg5[%c0_10, %c0_11] : memref<1x16xf32, #tpu.memory_space<vmem>>, vector<1x16xf32>
    %13 = arith.addf %11, %12 : vector<1x16xf32>
    %c0_12 = arith.constant 0 : index
    %c0_13 = arith.constant 0 : index
    %c0_14 = arith.constant 0 : index
    %14 = vector.load %arg6[%c0_12, %c0_13, %c0_14] : memref<1x1x16xf32, #tpu.memory_space<vmem>>, vector<1x1x16xf32>
    %15 = vector.shape_cast %14 : vector<1x1x16xf32> to vector<1x16xf32>
    %16 = vector.shape_cast %13 : vector<1x16xf32> to vector<1x1x16xf32>
    tpu.vector_store %arg6[%c0_12, %c0_13, %c0_14], %16 {strides = array<i32>} : memref<1x1x16xf32, #tpu.memory_space<vmem>>, vector<1x1x16xf32>,
    return
  }
  func.func @transform_0(%arg0: i32) -> (i32, i32) {
    %c0_i32 = arith.constant 0 : i32
    %c0_i32_0 = arith.constant 0 : i32
    return %c0_i32, %arg0 : i32, i32
  }
  func.func @transform_1(%arg0: i32) -> (i32, i32) {
    %c0_i32 = arith.constant 0 : i32
    %c0_i32_0 = arith.constant 0 : i32
    %c0_i32_1 = arith.constant 0 : i32
    return %c0_i32, %c0_i32_0 : i32, i32
  }
  func.func @transform_2(%arg0: i32) -> (i32, i32) {
    %c0_i32 = arith.constant 0 : i32
    %c0_i32_0 = arith.constant 0 : i32
    %c0_i32_1 = arith.constant 0 : i32
    return %c0_i32, %c0_i32_0 : i32, i32
  }
  func.func @transform_3(%arg0: i32) -> (i32, i32) {
    %c0_i32 = arith.constant 0 : i32
    %c0_i32_0 = arith.constant 0 : i32
    %c0_i32_1 = arith.constant 0 : i32
    return %c0_i32, %c0_i32_0 : i32, i32
  }
  func.func @transform_4(%arg0: i32) -> (i32, i32) {
    %c0_i32 = arith.constant 0 : i32
    %c0_i32_0 = arith.constant 0 : i32
    %c0_i32_1 = arith.constant 0 : i32
    return %c0_i32, %c0_i32_0 : i32, i32
  }
  func.func @transform_5(%arg0: i32) -> (i32, i32, i32) {
    %c0_i32 = arith.constant 0 : i32
    %c0_i32_0 = arith.constant 0 : i32
    %c0_i32_1 = arith.constant 0 : i32
    return %arg0, %c0_i32, %c0_i32_0 : i32, i32, i32
  }
}

</mosaic_0001>

<llo_original>
// kernel: _mean_teacher_forward.1
$region0: #{_mean_teacher_forward.1}
  #allocation0 [shape = 'u32[]', space=smem, size = 0x4, offset = 0x4, fixed_abs, tag = 'smem constant byte address 0x4 - core index']
  #allocation1 [shape = 'u32[72,128]{1,0:T(1,128)}', space=vmem, size = 0x9000, scoped, tag = 'internal scratch']
  %s0 = inlined_call_operand.vmem [shape: bf16[36,512], index: 0, kind: input, shape index: {}]
  %s1 = inlined_call_operand.vmem [shape: bf16[32,36], index: 1, kind: input, shape index: {}]
  %s2 = inlined_call_operand.vmem [shape: f32[32,1], index: 2, kind: input, shape index: {}]
  %s3 = inlined_call_operand.vmem [shape: f32[32,16], index: 3, kind: input, shape index: {}]
  %s4 = inlined_call_operand.vmem [shape: f32[1,16], index: 4, kind: input, shape index: {}]
  %s5 = inlined_call_operand.vmem [shape: f32[2,1,16], index: 5, kind: output, shape index: {}]
  %s6 = sld [smem:[#allocation0]]
  $region91: #{_mean_teacher_forward.1} parent=0
    _
  %s8 = ssub.s32 1, %s6
  %s9 = scalar_select 0, %s8, %s6
  $region1: #{_mean_teacher_forward.1} parent=0
    #allocation2 [shape = 'u8[40960]{0}', space=vmem, size = 0xa000, scoped, tag = 'input window, operand 0']
    loop: start=0, step=1, limit=4
    $region2: #{_mean_teacher_forward.1} parent=1 // loop_pre_header
      _
    $region3: #{_mean_teacher_forward.1} parent=1 // loop_header
      %s11 = sphi 0, %s15
      %p12 = scmp.ge.s32.totalorder %s11, 4
      %s21 = sphi 0, %s23
      %s24 = sphi 0, %s21
      %s25 = sphi 0, %s24
      %s41 = sphi 0, %s25
      %s45 = sphi 0, %s45
      %s47 = sphi 0, %s45
      %s48 = sphi 0, %s47
      %s62 = sphi 0, %s48
      %s66 = sphi 0, %s66
      %s68 = sphi 0, %s66
      %s69 = sphi 0, %s68
      %s83 = sphi 0, %s69
      %s87 = sphi 0, %s87
      %s89 = sphi 0, %s87
      %s90 = sphi 0, %s89
      %s104 = sphi 0, %s90
      %s108 = sphi 0, %s108
      %s110 = sphi 0, %s108
      %s111 = sphi 0, %s110
      %s125 = sphi 0, %s111
      %s131 = sphi 0, %s133
      %s134 = sphi 0, %s131
      %s135 = sphi 0, %s134
      %s151 = sphi 0, %s135
    $region4: #{_mean_teacher_forward.1} parent=1 // loop_header_branch
      %14 = sbr.rel (%p12) target = $region8
    $region5: #{_mean_teacher_forward.1} parent=1 // loop_body
      %s16 = ssub.s32 %s11, 1
      %s17 = ssub.s32 %s11, 2
      %s18 = sadd.s32 %s11, 1
      %s19 = ssub.s32 %s11, %s18
      %p20 = scmp.eq.s32.totalorder %s19, 0
      %s22 = sadd.s32 %s21, 1
      %s23 = scalar_select %p20, %s21, %s22
      %p26 = pneg %p20
      %p27 = scmp.eq.s32.totalorder %s11, 1
      %p28 = por %p26, %p27
      %p29 = scmp.ne.s32.totalorder %s21, %s24
      %p30 = scmp.eq.s32.totalorder %s11, 0
      %p31 = por %p29, %p30
      %p32 = scmp.ne.s32.totalorder %s21, %s24
      %p33 = scmp.eq.s32.totalorder %s16, 1
      %p34 = por %p32, %p33
      %p35 = scmp.ne.s32.totalorder %s24, %s25
      %p36 = scmp.eq.s32.totalorder %s16, 0
      %p37 = por %p35, %p36
      %p38 = scmp.ne.s32.totalorder %s24, %s25
      %p39 = scmp.eq.s32.totalorder %s17, 1
      %p40 = por %p38, %p39
      %p42 = scmp.ne.s32.totalorder %s25, %s41
      %p43 = scmp.eq.s32.totalorder %s17, 0
      %p44 = por %p42, %p43
      %s46 = sadd.s32 %s45, 1
      %p49 = scmp.eq.s32.totalorder %s11, 1
      %p50 = scmp.ne.s32.totalorder %s45, %s47
      %p51 = scmp.eq.s32.totalorder %s11, 0
      %p52 = por %p50, %p51
      %p53 = scmp.ne.s32.totalorder %s45, %s47
      %p54 = scmp.eq.s32.totalorder %s16, 1
      %p55 = por %p53, %p54
      %p56 = scmp.ne.s32.totalorder %s47, %s48
      %p57 = scmp.eq.s32.totalorder %s16, 0
      %p58 = por %p56, %p57
      %p59 = scmp.ne.s32.totalorder %s47, %s48
      %p60 = scmp.eq.s32.totalorder %s17, 1
      %p61 = por %p59, %p60
      %p63 = scmp.ne.s32.totalorder %s48, %s62
      %p64 = scmp.eq.s32.totalorder %s17, 0
      %p65 = por %p63, %p64
      %s67 = sadd.s32 %s66, 1
      %p70 = scmp.eq.s32.totalorder %s11, 1
      %p71 = scmp.ne.s32.totalorder %s66, %s68
      %p72 = scmp.eq.s32.totalorder %s11, 0
      %p73 = por %p71, %p72
      %p74 = scmp.ne.s32.totalorder %s66, %s68
      %p75 = scmp.eq.s32.totalorder %s16, 1
      %p76 = por %p74, %p75
      %p77 = scmp.ne.s32.totalorder %s68, %s69
      %p78 = scmp.eq.s32.totalorder %s16, 0
      %p79 = por %p77, %p78
      %p80 = scmp.ne.s32.totalorder %s68, %s69
      %p81 = scmp.eq.s32.totalorder %s17, 1
      %p82 = por %p80, %p81
      %p84 = scmp.ne.s32.totalorder %s69, %s83
      %p85 = scmp.eq.s32.totalorder %s17, 0
      %p86 = por %p84, %p85
      %s88 = sadd.s32 %s87, 1
      %p91 = scmp.eq.s32.totalorder %s11, 1
      %p92 = scmp.ne.s32.totalorder %s87, %s89
      %p93 = scmp.eq.s32.totalorder %s11, 0
      %p94 = por %p92, %p93
      %p95 = scmp.ne.s32.totalorder %s87, %s89
      %p96 = scmp.eq.s32.totalorder %s16, 1
      %p97 = por %p95, %p96
      %p98 = scmp.ne.s32.totalorder %s89, %s90
      %p99 = scmp.eq.s32.totalorder %s16, 0
      %p100 = por %p98, %p99
      %p101 = scmp.ne.s32.totalorder %s89, %s90
      %p102 = scmp.eq.s32.totalorder %s17, 1
      %p103 = por %p101, %p102
      %p105 = scmp.ne.s32.totalorder %s90, %s104
      %p106 = scmp.eq.s32.totalorder %s17, 0
      %p107 = por %p105, %p106
      %s109 = sadd.s32 %s108, 1
      %p112 = scmp.eq.s32.totalorder %s11, 1
      %p113 = scmp.ne.s32.totalorder %s108, %s110
      %p114 = scmp.eq.s32.totalorder %s11, 0
      %p115 = por %p113, %p114
      %p116 = scmp.ne.s32.totalorder %s108, %s110
      %p117 = scmp.eq.s32.totalorder %s16, 1
      %p118 = por %p116, %p117
      %p119 = scmp.ne.s32.totalorder %s110, %s111
      %p120 = scmp.eq.s32.totalorder %s16, 0
      %p121 = por %p119, %p120
      %p122 = scmp.ne.s32.totalorder %s110, %s111
      %p123 = scmp.eq.s32.totalorder %s17, 1
      %p124 = por %p122, %p123
      %p126 = scmp.ne.s32.totalorder %s111, %s125
      %p127 = scmp.eq.s32.totalorder %s17, 0
      %p128 = por %p126, %p127
      %s129 = ssub.s32 %s11, %s18
      %p130 = scmp.eq.s32.totalorder %s129, 0
      %s132 = sadd.s32 %s131, 1
      %s133 = scalar_select %p130, %s131, %s132
      %p136 = pneg %p130
      %p137 = scmp.eq.s32.totalorder %s11, 1
      %p138 = por %p136, %p137
      %p139 = scmp.ne.s32.totalorder %s131, %s134
      %p140 = scmp.eq.s32.totalorder %s11, 0
      %p141 = por %p139, %p140
      %p142 = scmp.ne.s32.totalorder %s131, %s134
      %p143 = scmp.eq.s32.totalorder %s16, 1
      %p144 = por %p142, %p143
      %p145 = scmp.ne.s32.totalorder %s134, %s135
      %p146 = scmp.eq.s32.totalorder %s16, 0
      %p147 = por %p145, %p146
      %p148 = scmp.ne.s32.totalorder %s134, %s135
      %p149 = scmp.eq.s32.totalorder %s17, 1
      %p150 = por %p148, %p149
      %p152 = scmp.ne.s32.totalorder %s135, %s151
      %p153 = scmp.eq.s32.totalorder %s17, 0
      %p154 = por %p152, %p153
      %p155 = scmp.le.s32.totalorder 1, %s11
      %p156 = scmp.lt.s32.totalorder %s11, 3
      %p157 = pnand %p155, %p156
      %p158 = pneg %p157
      // Predicated region
      $region9: #{_mean_teacher_forward.1} parent=5 // pred_check
        _
      $region10: #{_mean_teacher_forward.1} parent=5 // pred_check_branch
        %160 = sbr.rel (%p157) target = $region12
      $region11: #{_mean_teacher_forward.1} parent=5 // pred_region
        %s161 = ssub.s32 %s11, 1
        // Predicated region
        $region13: #{_mean_teacher_forward.1} parent=11 // pred_check
          %p162 = pneg %p58
        $region14: #{_mean_teacher_forward.1} parent=11 // pred_check_branch
          %164 = sbr.rel (%p162) target = $region16
        $region15: #{_mean_teacher_forward.1} parent=11 // pred_region
          _
        $region16: #{_mean_teacher_forward.1} parent=11 // pred_fallthru
          _
        // Predicated region
        $region17: #{_mean_teacher_forward.1} parent=11 // pred_check
          %p165 = pneg %p79
        $region18: #{_mean_teacher_forward.1} parent=11 // pred_check_branch
          %167 = sbr.rel (%p165) target = $region20
        $region19: #{_mean_teacher_forward.1} parent=11 // pred_region
          _
        $region20: #{_mean_teacher_forward.1} parent=11 // pred_fallthru
          _
        // Predicated region
        $region21: #{_mean_teacher_forward.1} parent=11 // pred_check
          %p168 = pneg %p100
        $region22: #{_mean_teacher_forward.1} parent=11 // pred_check_branch
          %170 = sbr.rel (%p168) target = $region24
        $region23: #{_mean_teacher_forward.1} parent=11 // pred_region
          _
        $region24: #{_mean_teacher_forward.1} parent=11 // pred_fallthru
          _
        // Predicated region
        $region25: #{_mean_teacher_forward.1} parent=11 // pred_check
          %p171 = pneg %p121
        $region26: #{_mean_teacher_forward.1} parent=11 // pred_check_branch
          %173 = sbr.rel (%p171) target = $region28
        $region27: #{_mean_teacher_forward.1} parent=11 // pred_region
          _
        $region28: #{_mean_teacher_forward.1} parent=11 // pred_fallthru
          _
      $region12: #{_mean_teacher_forward.1} parent=5 // pred_fallthru
        _
      %p174 = scmp.lt.s32.totalorder %s11, 2
      // Predicated region
      $region29: #{_mean_teacher_forward.1} parent=5 // pred_check
        %p175 = pneg %p174
      $region30: #{_mean_teacher_forward.1} parent=5 // pred_check_branch
        %177 = sbr.rel (%p175) target = $region32
      $region31: #{_mean_teacher_forward.1} parent=5 // pred_region
        // Predicated region
        $region33: #{_mean_teacher_forward.1} parent=31 // pred_check
          %p178 = pneg %p31
        $region34: #{_mean_teacher_forward.1} parent=31 // pred_check_branch
          %180 = sbr.rel (%p178) target = $region36
        $region35: #{_mean_teacher_forward.1} parent=31 // pred_region
          %s181 = sand.u32 %s21, 1
          %s182 = sand.u32 %s21, 1
          %s183 = smul.addr %s182, 40
          %s184 = scalar_lea.vmem [#allocation2], %s183
          %s185 = smul.u32 2, %s11
          %s186 = smul.addr %s185, 4
          %s187 = scalar_lea.vmem %s0, %s186
          // Predicated region
          $region37: #{_mean_teacher_forward.1} parent=35 // pred_check
            _
          $region38: #{_mean_teacher_forward.1} parent=35 // pred_check_branch
            %189 = sbr.rel (0) target = $region40
          $region39: #{_mean_teacher_forward.1} parent=35 // pred_region
            // Predicated region
            $region41: #{_mean_teacher_forward.1} parent=39 // pred_check
              _
            $region42: #{_mean_teacher_forward.1} parent=39 // pred_check_branch
              %191 = sbr.rel (0) target = $region44
            $region43: #{_mean_teacher_forward.1} parent=39 // pred_region
              // Predicated region
              $region56: #{_mean_teacher_forward.1} parent=43 // pred_check
                _
              $region57: #{_mean_teacher_forward.1} parent=43 // pred_check_branch
                %215 = sbr.rel (0) target = $region59
              $region58: #{_mean_teacher_forward.1} parent=43 // pred_region
                loop: start=0, step=1, limit=1
                $region60: #{_mean_teacher_forward.1} parent=58 // loop_pre_header
                  _
                $region61: #{_mean_teacher_forward.1} parent=58 // loop_header
                  %s217 = sphi 0, %s221
                  %p218 = scmp.ge.s32.totalorder %s217, 1
                  %s222 = sphi %s187, %s187
                  %s223 = sphi %s184, %s184
                $region62: #{_mean_teacher_forward.1} parent=58 // loop_header_branch
                  %220 = sbr.rel (%p218) target = $region66
                $region63: #{_mean_teacher_forward.1} parent=58 // loop_body
                  %v224 = vld [vmem:[%s222] sm:$0xff]
                  %225 = vst [vmem:[%s223] sm:$0xff] %v224
                  %v226 = vld [vmem:[%s222 + $0x10] sm:$0xff]
                  %227 = vst [vmem:[%s223 + $0x8] sm:$0xff] %v226
                  %v228 = vld [vmem:[%s222 + $0x20] sm:$0xff]
                  %229 = vst [vmem:[%s223 + $0x10] sm:$0xff] %v228
                  %v230 = vld [vmem:[%s222 + $0x30] sm:$0xff]
                  %231 = vst [vmem:[%s223 + $0x18] sm:$0xff] %v230
                  %v232 = vld [vmem:[%s222 + $0x40] sm:$0xff]
                  %233 = vst [vmem:[%s223 + $0x20] sm:$0xff] %v232
                $region64: #{_mean_teacher_forward.1} parent=58 // loop_footer
                  %s221 = sadd.s32 1, %s217
                $region65: #{_mean_teacher_forward.1} parent=58 // loop_footer_branch
                  %216 = sbr.rel target = $region61
                $region66: #{_mean_teacher_forward.1} parent=58 // loop_exit
                  _
              $region59: #{_mean_teacher_forward.1} parent=43 // pred_fallthru
                _
              // Predicated region
              $region67: #{_mean_teacher_forward.1} parent=43 // pred_check
                _
              $region68: #{_mean_teacher_forward.1} parent=43 // pred_check_branch
                %235 = sbr.rel target = $region70
              $region69: #{_mean_teacher_forward.1} parent=43 // pred_region
                _
              $region70: #{_mean_teacher_forward.1} parent=43 // pred_fallthru
                _
            $region44: #{_mean_teacher_forward.1} parent=39 // pred_fallthru
              _
            // Predicated region
            $region45: #{_mean_teacher_forward.1} parent=39 // pred_check
              _
            $region46: #{_mean_teacher_forward.1} parent=39 // pred_check_branch
              %193 = sbr.rel target = $region48
            $region47: #{_mean_teacher_forward.1} parent=39 // pred_region
              %s195 = ssub.s32 256, 1
              loop: start=0, step=1, limit=1
              $region49: #{_mean_teacher_forward.1} parent=47 // loop_pre_header
                _
              $region50: #{_mean_teacher_forward.1} parent=47 // loop_header
                %s197 = sphi 0, %s201
                %p198 = scmp.ge.s32.totalorder %s197, 1
                %s202 = sphi %s187, %s187
                %s203 = sphi %s184, %s184
              $region51: #{_mean_teacher_forward.1} parent=47 // loop_header_branch
                %200 = sbr.rel (%p198) target = $region55
              $region52: #{_mean_teacher_forward.1} parent=47 // loop_body
                %v204 = vld [vmem:[%s202] sm:%s195]
                %205 = vst [vmem:[%s203] sm:%s195] %v204
                %v206 = vld [vmem:[%s202 + $0x10] sm:%s195]
                %207 = vst [vmem:[%s203 + $0x8] sm:%s195] %v206
                %v208 = vld [vmem:[%s202 + $0x20] sm:%s195]
                %209 = vst [vmem:[%s203 + $0x10] sm:%s195] %v208
                %v210 = vld [vmem:[%s202 + $0x30] sm:%s195]
                %211 = vst [vmem:[%s203 + $0x18] sm:%s195] %v210
                %v212 = vld [vmem:[%s202 + $0x40] sm:%s195]
                %213 = vst [vmem:[%s203 + $0x20] sm:%s195] %v212
              $region53: #{_mean_teacher_forward.1} parent=47 // loop_footer
                %s201 = sadd.s32 1, %s197
              $region54: #{_mean_teacher_forward.1} parent=47 // loop_footer_branch
                %196 = sbr.rel target = $region50
              $region55: #{_mean_teacher_forward.1} parent=47 // loop_exit
                _
            $region48: #{_mean_teacher_forward.1} parent=39 // pred_fallthru
              _
          $region40: #{_mean_teacher_forward.1} parent=35 // pred_fallthru
            _
          %236 = vnop
        $region36: #{_mean_teacher_forward.1} parent=31 // pred_fallthru
          _
      $region32: #{_mean_teacher_forward.1} parent=5 // pred_fallthru
        _
      %p237 = scmp.le.s32.totalorder 1, %s11
      %p238 = scmp.lt.s32.totalorder %s11, 3
      %p239 = pnand %p237, %p238
      %p240 = pneg %p239
      // Predicated region
      $region71: #{_mean_teacher_forward.1} parent=5 // pred_check
        _
      $region72: #{_mean_teacher_forward.1} parent=5 // pred_check_branch
        %242 = sbr.rel (%p239) target = $region74
      $region73: #{_mean_teacher_forward.1} parent=5 // pred_region
        %s243 = ssub.s32 %s11, 1
        %s244 = sand.u32 %s24, 1
        %s245 = sand.u32 %s24, 1
        %s246 = smul.addr %s245, 40
        %s247 = scalar_lea.vmem [#allocation2], %s246
        // Predicated region
        $region75: #{_mean_teacher_forward.1} parent=73 // pred_check
          %p248 = pneg %p37
        $region76: #{_mean_teacher_forward.1} parent=73 // pred_check_branch
          %250 = sbr.rel (%p248) target = $region78
        $region77: #{_mean_teacher_forward.1} parent=73 // pred_region
          _
        $region78: #{_mean_teacher_forward.1} parent=73 // pred_fallthru
          _
        %s251 = sand.u32 %s24, 1
        %s252 = sand.u32 %s24, 1
        %s253 = smul.addr %s252, 40
        %s254 = scalar_lea.vmem [#allocation2], %s253
        %p255 = pneg %p37
        %p256 = pneg %p34
        %p257 = pneg %p58
        %p258 = pneg %p55
        %p259 = pneg %p79
        %p260 = pneg %p76
        %p261 = pneg %p100
        %p262 = pneg %p97
        %p263 = pneg %p121
        %p264 = pneg %p118
        %p265 = pneg %p147
        %p266 = pneg %p144
        %p267 = scmp.lt.s32.totalorder %s16, 1
        %s268 = scalar_select %p267, %s16, 1
        %s269 = scalar_lea.vmem %s5, %s268
        %s270 = smul.u32 2, %s16
        %p271 = scmp.lt.s32.totalorder %s16, 1
        %s272 = scalar_select %p271, %s16, 1
        %s273 = scalar_lea.vmem %s5, %s272
        %v275 = vld [vmem:[%s1] sm:$0xf]
        %v276 = vld [vmem:[%s1 + $0x4] sm:$0xf]
        %v277 = vld [vmem:[%s1 + $0x8] sm:$0xf]
        %v278 = vld [vmem:[%s1 + $0xc] sm:$0xf]
        %v279 = vld [vmem:[%s247] sm:$0xff]
        %v280 = vld [vmem:[%s247 + $0x8] sm:$0xff]
        %v281 = vld [vmem:[%s247 + $0x10] sm:$0xff]
        %v282 = vld [vmem:[%s247 + $0x18] sm:$0xff]
        %v283 = vld [vmem:[%s247 + $0x20] sm:$0x33]
        %v284 = vld [vmem:[%s2] sm:$0xff]
        %v285 = vld [vmem:[%s2 + $0x8] sm:$0xff]
        %v286 = vld [vmem:[%s2 + $0x10] sm:$0xff]
        %v287 = vld [vmem:[%s2 + $0x18] sm:$0xff]
        %289 = vset.pattern.permute.xlu0 0
        %290 = vperm.xlu0 %289, %v284
        %v291 = vpop.permute.xlu0 %290
        %294 = vset.pattern.permute.xlu0 0
        %295 = vperm.xlu0 %294, %v285
        %v296 = vpop.permute.xlu0 %295
        %299 = vset.pattern.permute.xlu0 0
        %300 = vperm.xlu0 %299, %v286
        %v301 = vpop.permute.xlu0 %300
        %304 = vset.pattern.permute.xlu0 0
        %305 = vperm.xlu0 %304, %v287
        %v306 = vpop.permute.xlu0 %305
        %v312 = vunpack.c.l.b16 %v275
        %v313 = vunpack.c.l.b16 %v276
        %v314 = vunpack.c.l.b16 %v277
        %v315 = vunpack.c.l.b16 %v278
        %v316 = vpack.c.b16 %v313, %v312
        %v317 = vpack.c.b16 %v315, %v314
        %v323 = vunpack.c.l.b16 %v279
        %v324 = vunpack.c.h.b16 %v279
        %v325 = vunpack.c.l.b16 %v280
        %v326 = vunpack.c.h.b16 %v280
        %v327 = vunpack.c.l.b16 %v281
        %v328 = vunpack.c.h.b16 %v281
        %v329 = vunpack.c.l.b16 %v282
        %v330 = vunpack.c.h.b16 %v282
        %v331 = vunpack.c.l.b16 %v283
        %v332 = vunpack.c.h.b16 %v283
        %v333 = vpack.c.b16 %v325, %v323
        %v334 = vpack.c.b16 %v326, %v324
        %v335 = vpack.c.b16 %v329, %v327
        %v336 = vpack.c.b16 %v330, %v328
        %v337 = vpack.c.b16 %v331, %v331
        %v338 = vpack.c.b16 %v332, %v332
        %vm343 = vcmask 293888
        %v345 = vsel %vm343, %v316, 0
        %v348 = vsel %vm343, %v317, 0
        %vm350 = vcmask 1041408
        %v352 = vsel %vm350, %v337, 0
        %v355 = vsel %vm350, %v338, 0
        %357 = vmatpush.bf16.msra.mxu0 0
        %358 = vmatpush.bf16.msra.mxu0 0
        %359 = vmatpush.bf16.msra.mxu0 0
        %360 = vmatpush.bf16.msra.mxu0 0
        %361 = vmatpush.bf16.msra.mxu0 0
        %362 = vmatpush.bf16.msra.mxu0 %v352
        %363 = vmatpush.bf16.msra.mxu0 %v335
        %364 = vmatpush.bf16.msra.mxu0 %v333
        %365 = vmatmul.bf16.gmra.mxu0 %v345
        %v366 = vpop.f32.mrf.mxu0
        %v367 = vadd.f32 %v291, %v366
        %v368 = vpop.f32.mrf.mxu0
        %v369 = vadd.f32 %v296, %v368
        %370 = vmatmul.bf16.gmra.mxu0 %v348
        %v371 = vpop.f32.mrf.mxu0
        %v372 = vadd.f32 %v301, %v371
        %v373 = vpop.f32.mrf.mxu0
        %v374 = vadd.f32 %v306, %v373
        %375 = vdwg.mxu0
        %376 = vmatpush.bf16.msra.mxu0 0
        %377 = vmatpush.bf16.msra.mxu0 0
        %378 = vmatpush.bf16.msra.mxu0 0
        %379 = vmatpush.bf16.msra.mxu0 0
        %380 = vmatpush.bf16.msra.mxu0 0
        %381 = vmatpush.bf16.msra.mxu0 %v355
        %382 = vmatpush.bf16.msra.mxu0 %v336
        %383 = vmatpush.bf16.msra.mxu0 %v334
        %384 = vmatmul.bf16.gmra.mxu0 %v345
        %v385 = vpop.f32.mrf.mxu0
        %v386 = vadd.f32 %v291, %v385
        %v387 = vpop.f32.mrf.mxu0
        %v388 = vadd.f32 %v296, %v387
        %389 = vmatmul.bf16.gmra.mxu0 %v348
        %v390 = vpop.f32.mrf.mxu0
        %v391 = vadd.f32 %v301, %v390
        %v392 = vpop.f32.mrf.mxu0
        %v393 = vadd.f32 %v306, %v392
        %394 = vdwg.mxu0
        %v395 = vmax.f32 %v367, 0.0
        %v396 = vmax.f32 %v386, 0.0
        %v397 = vmax.f32 %v369, 0.0
        %v398 = vmax.f32 %v388, 0.0
        %v399 = vmax.f32 %v372, 0.0
        %v400 = vmax.f32 %v391, 0.0
        %v401 = vmax.f32 %v374, 0.0
        %v402 = vmax.f32 %v393, 0.0
        %v403 = vadd.f32 %v395, %v396
        %404 = vadd.xlane.f32.xlu0 %v403
        %v405 = vpop.xlane.xlu0 %404
        %v406 = vadd.f32 %v397, %v398
        %407 = vadd.xlane.f32.xlu0 %v406
        %v408 = vpop.xlane.xlu0 %407
        %v409 = vadd.f32 %v399, %v400
        %410 = vadd.xlane.f32.xlu0 %v409
        %v411 = vpop.xlane.xlu0 %410
        %v412 = vadd.f32 %v401, %v402
        %413 = vadd.xlane.f32.xlu0 %v412
        %v414 = vpop.xlane.xlu0 %413
        %v415 = vld [vmem:[%s3] sm:$0xff]
        %v416 = vld [vmem:[%s3 + $0x8] sm:$0xff]
        %v417 = vld [vmem:[%s3 + $0x10] sm:$0xff]
        %v418 = vld [vmem:[%s3 + $0x18] sm:$0xff]
        %v419 = vld [vmem:[%s4] sm:$0x1]
        %420 = vxpose.xlu0.b32.start [1/16] %v405, 128
        %421 = vxpose.xlu0.b32.cont [2/16] %v408, 128
        %422 = vxpose.xlu0.b32.cont [3/16] %v411, 128
        %423 = vxpose.xlu0.b32.cont [4/16] %v414, 128
        %424 = vxpose.xlu0.b32.cont [5/16] 0.0, 128
        %425 = vxpose.xlu0.b32.cont [6/16] 0.0, 128
        %426 = vxpose.xlu0.b32.cont [7/16] 0.0, 128
        %427 = vxpose.xlu0.b32.cont [8/16] 0.0, 128
        %428 = vxpose.xlu0.b32.cont [9/16] 0.0, 128
        %429 = vxpose.xlu0.b32.cont [10/16] 0.0, 128
        %430 = vxpose.xlu0.b32.cont [11/16] 0.0, 128
        %431 = vxpose.xlu0.b32.cont [12/16] 0.0, 128
        %432 = vxpose.xlu0.b32.cont [13/16] 0.0, 128
        %433 = vxpose.xlu0.b32.cont [14/16] 0.0, 128
        %434 = vxpose.xlu0.b32.cont [15/16] 0.0, 128
        %435 = vxpose.xlu0.b32.end [16/16] 0.0, 128
        %v436 = vpop.trf.xlu0
        %v437 = vpop.trf.xlu0
        %v438 = vpop.trf.xlu0
        %v439 = vpop.trf.xlu0
        %v440 = vpop.trf.xlu0
        %v441 = vpop.trf.xlu0
        %v442 = vpop.trf.xlu0
        %v443 = vpop.trf.xlu0
        %v444 = vpop.trf.xlu0
        %v445 = vpop.trf.xlu0
        %v446 = vpop.trf.xlu0
        %v447 = vpop.trf.xlu0
        %v448 = vpop.trf.xlu0
        %v449 = vpop.trf.xlu0
        %v450 = vpop.trf.xlu0
        %v451 = vpop.trf.xlu0
        %vm452 = vcmask 261120
        %v454 = vsel %vm452, %v436, 0
        %456 = vmatpush.msra.mxu0 0.0
        %457 = vmatpush.msra.mxu0 0.0
        %458 = vmatpush.msra.mxu0 0.0
        %459 = vmatpush.msra.mxu0 0.0
        %460 = vmatpush.msra.mxu0 0.0
        %461 = vmatpush.msra.mxu0 0.0
        %462 = vmatpush.msra.mxu0 0.0
        %463 = vmatpush.msra.mxu0 0.0
        %464 = vmatpush.msra.mxu0 0.0
        %465 = vmatpush.msra.mxu0 0.0
        %466 = vmatpush.msra.mxu0 0.0
        %467 = vmatpush.msra.mxu0 0.0
        %468 = vmatpush.msra.mxu0 %v418
        %469 = vmatpush.msra.mxu0 %v417
        %470 = vmatpush.msra.mxu0 %v416
        %471 = vmatpush.msra.mxu0 %v415
        %472 = vmatmul.f32.gmra.mxu0 %v454
        %v473 = vpop.f32.mrf.mxu0
        %v474 = vadd.f32 %v419, %v473
        %475 = vdwg.mxu0
        %vm476 = vcmask 122880
        %477 = vst.msk [vmem:[%s273] sm:$0x1] %vm476, %v474
        %p478 = scmp.lt.s32.totalorder %s16, 1
        %s479 = scalar_select %p478, %s16, 1
        %s480 = scalar_lea.vmem %s5, %s479
        // Predicated region
        $region79: #{_mean_teacher_forward.1} parent=73 // pred_check
          %p481 = pneg %p144
        $region80: #{_mean_teacher_forward.1} parent=73 // pred_check_branch
          %483 = sbr.rel (%p481) target = $region82
        $region81: #{_mean_teacher_forward.1} parent=73 // pred_region
          _
        $region82: #{_mean_teacher_forward.1} parent=73 // pred_fallthru
          _
      $region74: #{_mean_teacher_forward.1} parent=5 // pred_fallthru
        _
      %p484 = scmp.le.s32.totalorder 2, %s11
      // Predicated region
      $region83: #{_mean_teacher_forward.1} parent=5 // pred_check
        %p485 = pneg %p484
      $region84: #{_mean_teacher_forward.1} parent=5 // pred_check_branch
        %487 = sbr.rel (%p485) target = $region86
      $region85: #{_mean_teacher_forward.1} parent=5 // pred_region
        %s488 = ssub.s32 %s11, 2
        // Predicated region
        $region87: #{_mean_teacher_forward.1} parent=85 // pred_check
          %p489 = pneg %p150
        $region88: #{_mean_teacher_forward.1} parent=85 // pred_check_branch
          %491 = sbr.rel (%p489) target = $region90
        $region89: #{_mean_teacher_forward.1} parent=85 // pred_region
          %p492 = scmp.lt.s32.totalorder %s17, 1
          %s493 = scalar_select %p492, %s17, 1
          %s494 = scalar_lea.vmem %s5, %s493
        $region90: #{_mean_teacher_forward.1} parent=85 // pred_fallthru
          _
      $region86: #{_mean_teacher_forward.1} parent=5 // pred_fallthru
        _
    $region6: #{_mean_teacher_forward.1} parent=1 // loop_footer
      %s15 = sadd.s32 1, %s11
    $region7: #{_mean_teacher_forward.1} parent=1 // loop_footer_branch
      %10 = sbr.rel target = $region3
    $region8: #{_mean_teacher_forward.1} parent=1 // loop_exit
      _

</llo_original>
